<compile_context>
chip_gen: v5e
topology: v5e:2x2
jax: 0.10.0
libtpu: 0.0.40
codegen_flags: <defaults>
</compile_context>

<pallas_src>
import functools

import numpy as np
import jax
import jax.numpy as jnp
from jax.experimental import pallas as pl
from jax.experimental.pallas import tpu as pltpu

# GATv2Conv hyper-parameters fixed by GNNPolicy.__init__
H1, C1 = 4, 16          # conv1: heads=4, out_channels=16, concat -> 64
H2, C2 = 2, 32          # conv2: heads=2, out_channels=32, concat -> 64
HC1, HC2 = H1 * C1, H2 * C2
HC = HC1                # == HC2 == 64, shared across both layers
NEG_SLOPE = 0.2         # GATv2Conv default negative_slope
NEG_INF = -1e30


def _round8(x):
    return -(-x // 8) * 8


def _slab_layout(f, hc, h):
    """Row offsets of the packed per-layer parameter slab (all 8-aligned)."""
    f_pad = _round8(f)
    wlr_o = 0
    blr_o = wlr_o + f_pad
    we_o = blr_o + 8
    att_o = we_o + 8
    rexp_o = att_o + hc
    bias_o = rexp_o + 8
    total = bias_o + 8
    return f_pad, wlr_o, blr_o, we_o, att_o, rexp_o, bias_o, total


def _head_expand(h, c):
    """R (H, H*C) with R[h, h*C + c] = 1: lane-expands a per-head scalar to C channels."""
    r = np.zeros((h, h * c), np.float32)
    for k in range(h):
        r[k, k * c:(k + 1) * c] = 1.0
    return jnp.asarray(r)


def _att_block_diag(att, h, c):
    """attbd (H*C, H) with attbd[h*C + c, h] = att[h, c]; zeros elsewhere."""
    return (att[:, :, None] * jnp.eye(h, dtype=att.dtype)[:, None, :]).reshape(h * c, h)


def _pad2(a, rows, cols):
    return jnp.pad(a, ((0, rows - a.shape[0]), (0, cols - a.shape[1])))


def _pack_layer_slab(wl, bl, wr, br, we, att, bias, h, c):
    """One (rows, 128) f32 slab per GATv2 layer; sections are 8-row aligned."""
    hc = h * c
    lanes = 2 * hc                     # 128 for both layers
    f_pad = _round8(wl.shape[0])
    wlr = jnp.concatenate([wl, wr], axis=1)   # [lin_l | lin_r]
    blr = jnp.concatenate([bl, br], axis=1)
    return jnp.concatenate([
        _pad2(wlr, f_pad, lanes),
        _pad2(blr, 8, lanes),
        _pad2(we, 8, lanes),
        _pad2(_att_block_diag(att, h, c), hc, lanes),
        _pad2(_head_expand(h, c), 8, lanes),
        _pad2(bias, 8, lanes),
    ], axis=0)


def _pack_head_slab(wa, ba):
    a_dim = wa.shape[1]
    return jnp.concatenate([wa, ba, jnp.zeros((7, a_dim), wa.dtype)], axis=0)


@functools.lru_cache(maxsize=None)
def _graph_constants(n):
    """Constant 0/1 selection matrices, cached per graph size (built once on host)."""
    rows = np.arange(n * n)
    sr = np.zeros((n * n, n), np.float32)
    sr[rows, rows // n] = 1.0          # Sr[i*N+j, i] = 1  (broadcast target rows)
    sl = np.zeros((n * n, n), np.float32)
    sl[rows, rows % n] = 1.0           # Sl[i*N+j, j] = 1  (broadcast source rows)
    srsl = np.ascontiguousarray(np.concatenate([sr, sl], axis=1))   # (N*N, 2N)
    srt = np.ascontiguousarray(sr.T)                                 # (N, N*N)
    return srsl, srt


def _make_kernel(n, f_in):
    lay1 = _slab_layout(f_in, HC1, H1)
    lay2 = _slab_layout(HC1, HC2, H2)

    def kernel(x_ref, a_ref, srt_ref, mask_ref, slab1_ref, slab2_ref, head_ref,
               out_ref, b_scr, p_scr):
        f32 = jnp.float32

        def dot(a, b):
            return jnp.dot(a, b, preferred_element_type=f32)

        a_mat = a_ref[...]        # (N*N, 2N+2)  [Sr | Sl | edge_feat]
        srt = srt_ref[...]        # (N, N*N)     Sr^T (segmented sum over sources)
        mask_all = mask_ref[...]  # (N*N, H1)    1.0 iff edge j->i, pre-broadcast on heads

        # Zero-init the fused-matmul operand scratch once; only the sections written
        # below are ever made non-zero (and are rewritten every layer).
        b_scr[...] = jnp.zeros_like(b_scr)

        def gatv2(xin, slab_ref, lay, h):
            hc = HC
            f_pad, wlr_o, blr_o, we_o, att_o, rexp_o, bias_o, _ = lay
            wlr = slab_ref[wlr_o:wlr_o + f_pad, :]       # (f_pad, 2hc) [lin_l | lin_r]
            blr = slab_ref[blr_o:blr_o + 1, :]           # (1, 2hc)
            we = slab_ref[we_o:we_o + 2, 0:hc]           # (2, hc)   lin_edge (in-kernel)
            attbd = slab_ref[att_o:att_o + hc, 0:h]      # (hc, h)   block-diagonal att
            rexp = slab_ref[rexp_o:rexp_o + h, 0:hc]     # (h, hc)   head -> channel expand
            bias = slab_ref[bias_o:bias_o + 1, 0:hc]     # (1, hc)
            mask = mask_all[:, 0:h]                      # (N*N, h)

            # lin_l | lin_r fused: ONE lane-dense 128-wide MXU matmul.
            xlr = dot(xin, wlr) + blr                    # (N, 2hc): [xl | xr]

            # Assemble B = [[xr, 0], [xl, xl], [We, 0]]; one MXU contraction then yields
            # both t_ij = xr_i + xl_j + ee_ij (left half) and xl_b = xl[j] broadcast over
            # targets (right half), replacing four separate matmuls + two full-tile adds.
            b_scr[0:n, 0:hc] = xlr[:, hc:]               # xr
            b_scr[n:2 * n, 0:hc] = xlr[:, :hc]           # xl (for t)
            b_scr[n:2 * n, hc:] = xlr[:, :hc]            # xl (for xl_b)
            b_scr[2 * n:2 * n + 2, 0:hc] = we
            t2 = dot(a_mat, b_scr[...])                  # (N*N, 2hc)
            xl_b = t2[:, hc:]                            # (N*N, hc)
            t = t2[:, 0:hc]
            t = jnp.where(t > 0.0, t, NEG_SLOPE * t)     # LeakyReLU

            # Raw attention scores: one matmul against the block-diagonal att matrix.
            s = dot(t, attbd)                            # (N*N, h)

            # Masked softmax over sources.  A single global per-head *masked* max is a
            # valid shift-invariant stabilizer (assumes the per-head edge-logit spread
            # stays < ~80 so no full row of exps underflows; the clamp below guards the
            # degenerate case).  Non-edges contribute exactly zero via the post-exp mask.
            s_m = jnp.where(mask > 0.0, s, NEG_INF)
            m = jnp.max(s_m, axis=0, keepdims=True)      # (1, h)
            e = jnp.exp(s_m - m) * mask                  # (N*N, h)

            # Pack [msg | e] into scratch and reduce over sources with ONE Sr^T matmul:
            #   res = [ sum_j e*xl[j]  |  sum_j e ]  ->  [agg | den].
            p_scr[:, 0:hc] = dot(e, rexp) * xl_b         # msg[i*N+j] = e[i,j,h] * xl[j]
            p_scr[:, hc:hc + h] = e
            res = dot(srt, p_scr[:, 0:hc + h])           # (N, hc + h)
            agg = res[:, 0:hc]
            den = res[:, hc:hc + h]
            # Approximate reciprocal on the EUP (~1e-3 relative on the normalizer).
            inv = pl.reciprocal(jnp.maximum(den, 1e-20), approx=True)
            return agg * dot(inv, rexp) + bias           # (N, hc)

        # conv1: GATv2Conv(F_in -> 16, heads=4, concat, edge_dim=2) + ReLU
        h1 = jnp.maximum(gatv2(x_ref[...], slab1_ref, lay1, H1), 0.0)
        # conv2: GATv2Conv(64 -> 32, heads=2, concat, edge_dim=2) + ReLU
        h2 = jnp.maximum(gatv2(h1, slab2_ref, lay2, H2), 0.0)
        # action_mean_head + tanh, single full-tile store.
        wa = head_ref[0:HC2, :]
        ba = head_ref[HC2:HC2 + 1, :]
        out_ref[...] = jnp.tanh(dot(h2, wa) + ba)

    return kernel


def _gnn_policy_forward(x, adj_mask, edge_feat, params):
    """x: (N, F); adj_mask: (N, N), adj_mask[i, j] = 1 iff edge j->i (self-loops included);
    edge_feat: (N, N, 2) dense edge attributes (self-loop attrs = mean fill)."""
    (wl1, bl1, wr1, br1, we1, att1, b1,
     wl2, bl2, wr2, br2, we2, att2, b2,
     wa, ba) = params
    n, f = x.shape
    a_dim = wa.shape[1]
    f_pad = _round8(f)

    # Cached 0/1 selection constants; A = [Sr | Sl | ef] feeds the fused pre-activation
    # matmul, Sr^T feeds the fused [aggregate | denominator] reduction.
    srsl, srt = _graph_constants(n)
    a_mat = jnp.concatenate([jnp.asarray(srsl), edge_feat.reshape(n * n, 2)], axis=1)
    mask_h = jnp.broadcast_to(adj_mask.reshape(n * n, 1), (n * n, H1))
    x_pad = jnp.pad(x, ((0, 0), (0, f_pad - f)))

    # 7 inputs total (vs 26 before): fewer DMA descriptors / VMEM windows.
    slab1 = _pack_layer_slab(wl1, bl1, wr1, br1, we1, att1, b1, H1, C1)
    slab2 = _pack_layer_slab(wl2, bl2, wr2, br2, we2, att2, b2, H2, C2)
    head = _pack_head_slab(wa, ba)
    args = (x_pad, a_mat, jnp.asarray(srt), mask_h, slab1, slab2, head)

    kernel = _make_kernel(n, f)

    # NOTE: at N=8 every operand fits whole-array in VMEM on v5e/v6e/v7x, so no grid is
    # needed.  For batched graphs: on v6e/v7x first stack several graphs block-diagonally
    # along the sublane dim of the (N*N, .) tensors inside ONE invocation (target matmuls
    # >= (256, 128) to fill the 256-wide MXU; per-grid-step overhead ~0.35us would dwarf a
    # single tiny graph), then add a leading batch grid axis with
    # dimension_semantics=("parallel", ...) so v7x's two TensorCores split it, and re-size
    # blocks for v7x's 64 MiB VMEM (32 MiB default scoped limit), not v5e/v6e's 128 MiB.
    return pl.pallas_call(
        kernel,
        out_shape=jax.ShapeDtypeStruct((n, a_dim), jnp.float32),
        in_specs=[pl.BlockSpec(memory_space=pltpu.MemorySpace.VMEM) for _ in args],
        out_specs=pl.BlockSpec(memory_space=pltpu.MemorySpace.VMEM),
        scratch_shapes=[
            pltpu.VMEM((2 * n + 2, 2 * HC), jnp.float32),   # B operand of the fused matmul
            pltpu.VMEM((n * n, HC + H1), jnp.float32),      # packed [msg | e]
        ],
    )(*args)


# jit so the host-side constant construction, param packing and pallas lowering happen once.
gnn_policy_forward = jax.jit(_gnn_policy_forward)


def gnn_policy_reference(x, adj_mask, edge_feat, params):
    """Pure-JAX dense reference (same math, different vectorization)."""
    (wl1, bl1, wr1, br1, we1, att1, b1,
     wl2, bl2, wr2, br2, we2, att2, b2, wa, ba) = params
    n = x.shape[0]

    def gatv2(xin, wl, bl, wr, br, we, att, bias, H, C):
        xl = (xin @ wl + bl).reshape(n, H, C)
        xr = (xin @ wr + br).reshape(n, H, C)
        ee = (edge_feat.reshape(n * n, 2) @ we).reshape(n, n, H, C)
        t = xr[:, None] + xl[None, :] + ee               # (i, j, H, C)
        t = jnp.where(t > 0, t, NEG_SLOPE * t)
        s = (t * att[None, None]).sum(-1)                # (i, j, H)
        s = jnp.where(adj_mask[:, :, None] > 0, s, NEG_INF)
        m = s.max(axis=1, keepdims=True)
        e = jnp.exp(s - m) * adj_mask[:, :, None]
        alpha = e / e.sum(axis=1, keepdims=True)
        out = jnp.einsum('ijh,jhc->ihc', alpha, xl).reshape(n, H * C)
        return out + bias

    h1 = jax.nn.relu(gatv2(x, wl1, bl1, wr1, br1, we1, att1, b1, H1, C1))
    h2 = jax.nn.relu(gatv2(h1, wl2, bl2, wr2, br2, we2, att2, b2, H2, C2))
    return jnp.tanh(h2 @ wa + ba)


if __name__ == "__main__":
    # TODO(synk): get_action() sampling (Normal dist) and update() (Adam, REINFORCE loss)
    # are host-side training utilities, not part of the forward pass kernel.
    N = 8            # number of graph nodes
    F_IN = 6         # node_feature_dim
    ACTION_DIM = 4   # action_dim

    key = jax.random.PRNGKey(0)
    ks = jax.random.split(key, 24)

    x = jax.random.normal(ks[0], (N, F_IN), jnp.float32)

    # Directed graph (no self-loops, no duplicate edges): i -> (i+1)%N and i -> (i+3)%N.
    src = np.repeat(np.arange(N), 2)
    dst = np.stack([(np.arange(N) + 1) % N, (np.arange(N) + 3) % N], axis=1).reshape(-1)
    edge_attr = np.asarray(jax.random.normal(ks[1], (src.shape[0], 2), jnp.float32))

    # Densify + GATv2Conv's add_self_loops(fill_value='mean'):
    adj = np.zeros((N, N), np.float32)        # adj[i, j] = 1 iff edge j -> i
    efeat = np.zeros((N, N, 2), np.float32)
    adj[dst, src] = 1.0
    efeat[dst, src] = edge_attr
    deg = np.zeros((N,), np.float32)
    np.add.at(deg, dst, 1.0)
    esum = np.zeros((N, 2), np.float32)
    np.add.at(esum, dst, edge_attr)
    loop_attr = np.where(deg[:, None] > 0, esum / np.maximum(deg, 1.0)[:, None], 0.0)
    idx = np.arange(N)
    adj[idx, idx] = 1.0
    efeat[idx, idx] = loop_attr

    adj = jnp.asarray(adj)
    efeat = jnp.asarray(efeat)

    def init(k, shape, scale=0.3):
        return (scale * jax.random.normal(k, shape)).astype(jnp.float32)

    params = (
        # conv1 = GATv2Conv(F_IN, 16, heads=4, concat=True, edge_dim=2)
        init(ks[2], (F_IN, HC1)), init(ks[3], (1, HC1), 0.05),    # lin_l  W, b
        init(ks[4], (F_IN, HC1)), init(ks[5], (1, HC1), 0.05),    # lin_r  W, b
        init(ks[6], (2, HC1)),                                    # lin_edge W (no bias)
        init(ks[7], (H1, C1)),                                    # att
        init(ks[8], (1, HC1), 0.05),                              # output bias
        # conv2 = GATv2Conv(64, 32, heads=2, concat=True, edge_dim=2)
        init(ks[9], (HC1, HC2)), init(ks[10], (1, HC2), 0.05),
        init(ks[11], (HC1, HC2)), init(ks[12], (1, HC2), 0.05),
        init(ks[13], (2, HC2)),
        init(ks[14], (H2, C2)),
        init(ks[15], (1, HC2), 0.05),
        # action_mean_head = Linear(64, ACTION_DIM)
        init(ks[16], (HC2, ACTION_DIM)), init(ks[17], (1, ACTION_DIM), 0.05),
    )

    out = gnn_policy_forward(x, adj, efeat, params)
    jax.block_until_ready(out)

    ref = gnn_policy_reference(x, adj, efeat, params)
    # 5e-3 tolerance: the kernel normalizes the softmax with the EUP's approximate
    # reciprocal (pl.reciprocal(..., approx=True)); everything else is exact f32.
    np.testing.assert_allclose(np.asarray(out), np.asarray(ref), rtol=5e-3, atol=5e-3)
    print("KERNEL_OK")
</pallas_src>

<mosaic_0001>
module attributes {stable_mosaic.version = 11 : i64} {
  func.func @kernel(%arg0: memref<8x8xf32, #tpu.memory_space<vmem>>, %arg1: memref<64x18xf32, #tpu.memory_space<vmem>>, %arg2: memref<8x64xf32, #tpu.memory_space<vmem>>, %arg3: memref<64x4xf32, #tpu.memory_space<vmem>>, %arg4: memref<104x128xf32, #tpu.memory_space<vmem>>, %arg5: memref<160x128xf32, #tpu.memory_space<vmem>>, %arg6: memref<72x4xf32, #tpu.memory_space<vmem>>, %arg7: memref<8x4xf32, #tpu.memory_space<vmem>>, %arg8: memref<18x128xf32, #tpu.memory_space<vmem>>, %arg9: memref<64x68xf32, #tpu.memory_space<vmem>>) attributes {dimension_semantics = [], scalar_prefetch = 0 : i64, scratch_operands = 2 : i64, tpu.core_type = #tpu.core_type<tc>} {
    %c0 = arith.constant 0 : index
    %c0_0 = arith.constant 0 : index
    %0 = vector.load %arg1[%c0, %c0_0] : memref<64x18xf32, #tpu.memory_space<vmem>>, vector<64x18xf32>
    %c0_1 = arith.constant 0 : index
    %c0_2 = arith.constant 0 : index
    %1 = vector.load %arg2[%c0_1, %c0_2] : memref<8x64xf32, #tpu.memory_space<vmem>>, vector<8x64xf32>
    %c0_3 = arith.constant 0 : index
    %c0_4 = arith.constant 0 : index
    %2 = vector.load %arg3[%c0_3, %c0_4] : memref<64x4xf32, #tpu.memory_space<vmem>>, vector<64x4xf32>
    %cst = arith.constant 0.000000e+00 : f32
    %3 = vector.broadcast %cst : f32 to vector<18x128xf32>
    %c0_5 = arith.constant 0 : index
    %c0_6 = arith.constant 0 : index
    %4 = vector.load %arg8[%c0_5, %c0_6] : memref<18x128xf32, #tpu.memory_space<vmem>>, vector<18x128xf32>
    tpu.vector_store %arg8[%c0_5, %c0_6], %3 {strides = array<i32>} : memref<18x128xf32, #tpu.memory_space<vmem>>, vector<18x128xf32>,
    %c0_7 = arith.constant 0 : index
    %c0_8 = arith.constant 0 : index
    %5 = vector.load %arg0[%c0_7, %c0_8] : memref<8x8xf32, #tpu.memory_space<vmem>>, vector<8x8xf32>
    %c0_9 = arith.constant 0 : index
    %c0_10 = arith.constant 0 : index
    %6 = vector.load %arg4[%c0_9, %c0_10] : memref<104x128xf32, #tpu.memory_space<vmem>>, vector<8x128xf32>
    %c8 = arith.constant 8 : index
    %c0_11 = arith.constant 0 : index
    %7 = vector.load %arg4[%c8, %c0_11] : memref<104x128xf32, #tpu.memory_space<vmem>>, vector<1x128xf32>
    %c16 = arith.constant 16 : index
    %c0_12 = arith.constant 0 : index
    %8 = vector.load %arg4[%c16, %c0_12] : memref<104x128xf32, #tpu.memory_space<vmem>>, vector<2x64xf32>
    %c24 = arith.constant 24 : index
    %c0_13 = arith.constant 0 : index
    %9 = vector.load %arg4[%c24, %c0_13] : memref<104x128xf32, #tpu.memory_space<vmem>>, vector<64x4xf32>
    %c88 = arith.constant 88 : index
    %c0_14 = arith.constant 0 : index
    %10 = vector.load %arg4[%c88, %c0_14] : memref<104x128xf32, #tpu.memory_space<vmem>>, vector<4x64xf32>
    %c96 = arith.constant 96 : index
    %c0_15 = arith.constant 0 : index
    %11 = vector.load %arg4[%c96, %c0_15] : memref<104x128xf32, #tpu.memory_space<vmem>>, vector<1x64xf32>
    %cst_16 = arith.constant dense<0.000000e+00> : vector<8x128xf32>
    %12 = tpu.matmul %5, %6, %cst_16 {dimension_numbers = #tpu.dot_dimension_numbers<[1], [0], [0], [1], [0, 0, 1, 1], [], []>} : vector<8x8xf32>, vector<8x128xf32>, vector<8x128xf32> -> vector<8x128xf32>
    %13 = vector.broadcast %7 : vector<1x128xf32> to vector<8x128xf32>
    %14 = arith.addf %12, %13 : vector<8x128xf32>
    %15 = vector.extract_strided_slice %14 {offsets = [0, 64], sizes = [8, 64], strides = [1, 1]} : vector<8x128xf32> to vector<8x64xf32>
    %c0_17 = arith.constant 0 : index
    %c0_18 = arith.constant 0 : index
    %16 = vector.load %arg8[%c0_17, %c0_18] : memref<18x128xf32, #tpu.memory_space<vmem>>, vector<8x64xf32>
    tpu.vector_store %arg8[%c0_17, %c0_18], %15 {strides = array<i32>} : memref<18x128xf32, #tpu.memory_space<vmem>>, vector<8x64xf32>,
    %17 = vector.extract_strided_slice %14 {offsets = [0, 0], sizes = [8, 64], strides = [1, 1]} : vector<8x128xf32> to vector<8x64xf32>
    %c8_19 = arith.constant 8 : index
    %c0_20 = arith.constant 0 : index
    %18 = vector.load %arg8[%c8_19, %c0_20] : memref<18x128xf32, #tpu.memory_space<vmem>>, vector<8x64xf32>
    tpu.vector_store %arg8[%c8_19, %c0_20], %17 {strides = array<i32>} : memref<18x128xf32, #tpu.memory_space<vmem>>, vector<8x64xf32>,
    %19 = vector.extract_strided_slice %14 {offsets = [0, 0], sizes = [8, 64], strides = [1, 1]} : vector<8x128xf32> to vector<8x64xf32>
    %c8_21 = arith.constant 8 : index
    %c64 = arith.constant 64 : index
    %20 = vector.load %arg8[%c8_21, %c64] : memref<18x128xf32, #tpu.memory_space<vmem>>, vector<8x64xf32>
    tpu.vector_store %arg8[%c8_21, %c64], %19 {strides = array<i32>} : memref<18x128xf32, #tpu.memory_space<vmem>>, vector<8x64xf32>,
    %c16_22 = arith.constant 16 : index
    %c0_23 = arith.constant 0 : index
    %21 = vector.load %arg8[%c16_22, %c0_23] : memref<18x128xf32, #tpu.memory_space<vmem>>, vector<2x64xf32>
    tpu.vector_store %arg8[%c16_22, %c0_23], %8 {strides = array<i32>} : memref<18x128xf32, #tpu.memory_space<vmem>>, vector<2x64xf32>,
    %c0_24 = arith.constant 0 : index
    %c0_25 = arith.constant 0 : index
    %22 = vector.load %arg8[%c0_24, %c0_25] : memref<18x128xf32, #tpu.memory_space<vmem>>, vector<18x128xf32>
    %cst_26 = arith.constant dense<0.000000e+00> : vector<64x128xf32>
    %23 = tpu.matmul %0, %22, %cst_26 {dimension_numbers = #tpu.dot_dimension_numbers<[1], [0], [0], [1], [0, 0, 1, 1], [], []>} : vector<64x18xf32>, vector<18x128xf32>, vector<64x128xf32> -> vector<64x128xf32>
    %24 = vector.extract_strided_slice %23 {offsets = [0, 64], sizes = [64, 64], strides = [1, 1]} : vector<64x128xf32> to vector<64x64xf32>
    %25 = vector.extract_strided_slice %23 {offsets = [0, 0], sizes = [64, 64], strides = [1, 1]} : vector<64x128xf32> to vector<64x64xf32>
    %cst_27 = arith.constant 0.000000e+00 : f32
    %26 = vector.broadcast %cst_27 : f32 to vector<64x64xf32>
    %27 = arith.cmpf ogt, %25, %26 : vector<64x64xf32>
    %cst_28 = arith.constant 2.000000e-01 : f32
    %28 = vector.broadcast %cst_28 : f32 to vector<64x64xf32>
    %29 = arith.mulf %28, %25 : vector<64x64xf32>
    %30 = arith.select %27, %25, %29 : vector<64x64xi1>, vector<64x64xf32>
    %cst_29 = arith.constant dense<0.000000e+00> : vector<64x4xf32>
    %31 = tpu.matmul %30, %9, %cst_29 {dimension_numbers = #tpu.dot_dimension_numbers<[1], [0], [0], [1], [0, 0, 1, 1], [], []>} : vector<64x64xf32>, vector<64x4xf32>, vector<64x4xf32> -> vector<64x4xf32>
    %cst_30 = arith.constant 0.000000e+00 : f32
    %32 = vector.broadcast %cst_30 : f32 to vector<64x4xf32>
    %33 = arith.cmpf ogt, %2, %32 : vector<64x4xf32>
    %cst_31 = arith.constant -1.000000e+30 : f32
    %34 = vector.broadcast %cst_31 : f32 to vector<64x4xf32>
    %35 = arith.select %33, %31, %34 : vector<64x4xi1>, vector<64x4xf32>
    %cst_32 = arith.constant dense<0xFF800000> : vector<4xf32>
    %36 = vector.multi_reduction <maximumf>, %35, %cst_32 [0] : vector<64x4xf32> to vector<4xf32>
    %37 = vector.shape_cast %36 : vector<4xf32> to vector<1x4xf32>
    %38 = vector.broadcast %37 : vector<1x4xf32> to vector<64x4xf32>
    %39 = arith.subf %35, %38 : vector<64x4xf32>
    %40 = math.exp %39 : vector<64x4xf32>
    %41 = arith.mulf %40, %2 : vector<64x4xf32>
    %cst_33 = arith.constant dense<0.000000e+00> : vector<64x64xf32>
    %42 = tpu.matmul %41, %10, %cst_33 {dimension_numbers = #tpu.dot_dimension_numbers<[1], [0], [0], [1], [0, 0, 1, 1], [], []>} : vector<64x4xf32>, vector<4x64xf32>, vector<64x64xf32> -> vector<64x64xf32>
    %43 = arith.mulf %42, %24 : vector<64x64xf32>
    %c0_34 = arith.constant 0 : index
    %c0_35 = arith.constant 0 : index
    %44 = vector.load %arg9[%c0_34, %c0_35] : memref<64x68xf32, #tpu.memory_space<vmem>>, vector<64x64xf32>
    tpu.vector_store %arg9[%c0_34, %c0_35], %43 {strides = array<i32>} : memref<64x68xf32, #tpu.memory_space<vmem>>, vector<64x64xf32>,
    %c0_36 = arith.constant 0 : index
    %c64_37 = arith.constant 64 : index
    %45 = vector.load %arg9[%c0_36, %c64_37] : memref<64x68xf32, #tpu.memory_space<vmem>>, vector<64x4xf32>
    tpu.vector_store %arg9[%c0_36, %c64_37], %41 {strides = array<i32>} : memref<64x68xf32, #tpu.memory_space<vmem>>, vector<64x4xf32>,
    %c0_38 = arith.constant 0 : index
    %c0_39 = arith.constant 0 : index
    %46 = vector.load %arg9[%c0_38, %c0_39] : memref<64x68xf32, #tpu.memory_space<vmem>>, vector<64x68xf32>
    %cst_40 = arith.constant dense<0.000000e+00> : vector<8x68xf32>
    %47 = tpu.matmul %1, %46, %cst_40 {dimension_numbers = #tpu.dot_dimension_numbers<[1], [0], [0], [1], [0, 0, 1, 1], [], []>} : vector<8x64xf32>, vector<64x68xf32>, vector<8x68xf32> -> vector<8x68xf32>
    %48 = vector.extract_strided_slice %47 {offsets = [0, 0], sizes = [8, 64], strides = [1, 1]} : vector<8x68xf32> to vector<8x64xf32>
    %49 = vector.extract_strided_slice %47 {offsets = [0, 64], sizes = [8, 4], strides = [1, 1]} : vector<8x68xf32> to vector<8x4xf32>
    %cst_41 = arith.constant 9.99999968E-21 : f32
    %50 = vector.broadcast %cst_41 : f32 to vector<8x4xf32>
    %51 = arith.maximumf %49, %50 : vector<8x4xf32>
    %52 = tpu.reciprocal %51 {approx = true} : vector<8x4xf32> -> vector<8x4xf32>
    %cst_42 = arith.constant dense<0.000000e+00> : vector<8x64xf32>
    %53 = tpu.matmul %52, %10, %cst_42 {dimension_numbers = #tpu.dot_dimension_numbers<[1], [0], [0], [1], [0, 0, 1, 1], [], []>} : vector<8x4xf32>, vector<4x64xf32>, vector<8x64xf32> -> vector<8x64xf32>
    %54 = arith.mulf %48, %53 : vector<8x64xf32>
    %55 = vector.broadcast %11 : vector<1x64xf32> to vector<8x64xf32>
    %56 = arith.addf %54, %55 : vector<8x64xf32>
    %cst_43 = arith.constant 0.000000e+00 : f32
    %57 = vector.broadcast %cst_43 : f32 to vector<8x64xf32>
    %58 = arith.maximumf %56, %57 : vector<8x64xf32>
    %c0_44 = arith.constant 0 : index
    %c0_45 = arith.constant 0 : index
    %59 = vector.load %arg5[%c0_44, %c0_45] : memref<160x128xf32, #tpu.memory_space<vmem>>, vector<64x128xf32>
    %c64_46 = arith.constant 64 : index
    %c0_47 = arith.constant 0 : index
    %60 = vector.load %arg5[%c64_46, %c0_47] : memref<160x128xf32, #tpu.memory_space<vmem>>, vector<1x128xf32>
    %c72 = arith.constant 72 : index
    %c0_48 = arith.constant 0 : index
    %61 = vector.load %arg5[%c72, %c0_48] : memref<160x128xf32, #tpu.memory_space<vmem>>, vector<2x64xf32>
    %c80 = arith.constant 80 : index
    %c0_49 = arith.constant 0 : index
    %62 = vector.load %arg5[%c80, %c0_49] : memref<160x128xf32, #tpu.memory_space<vmem>>, vector<64x2xf32>
    %c144 = arith.constant 144 : index
    %c0_50 = arith.constant 0 : index
    %63 = vector.load %arg5[%c144, %c0_50] : memref<160x128xf32, #tpu.memory_space<vmem>>, vector<2x64xf32>
    %c152 = arith.constant 152 : index
    %c0_51 = arith.constant 0 : index
    %64 = vector.load %arg5[%c152, %c0_51] : memref<160x128xf32, #tpu.memory_space<vmem>>, vector<1x64xf32>
    %65 = vector.extract_strided_slice %2 {offsets = [0, 0], sizes = [64, 2], strides = [1, 1]} : vector<64x4xf32> to vector<64x2xf32>
    %cst_52 = arith.constant dense<0.000000e+00> : vector<8x128xf32>
    %66 = tpu.matmul %58, %59, %cst_52 {dimension_numbers = #tpu.dot_dimension_numbers<[1], [0], [0], [1], [0, 0, 1, 1], [], []>} : vector<8x64xf32>, vector<64x128xf32>, vector<8x128xf32> -> vector<8x128xf32>
    %67 = vector.broadcast %60 : vector<1x128xf32> to vector<8x128xf32>
    %68 = arith.addf %66, %67 : vector<8x128xf32>
    %69 = vector.extract_strided_slice %68 {offsets = [0, 64], sizes = [8, 64], strides = [1, 1]} : vector<8x128xf32> to vector<8x64xf32>
    %c0_53 = arith.constant 0 : index
    %c0_54 = arith.constant 0 : index
    %70 = vector.load %arg8[%c0_53, %c0_54] : memref<18x128xf32, #tpu.memory_space<vmem>>, vector<8x64xf32>
    tpu.vector_store %arg8[%c0_53, %c0_54], %69 {strides = array<i32>} : memref<18x128xf32, #tpu.memory_space<vmem>>, vector<8x64xf32>,
    %71 = vector.extract_strided_slice %68 {offsets = [0, 0], sizes = [8, 64], strides = [1, 1]} : vector<8x128xf32> to vector<8x64xf32>
    %c8_55 = arith.constant 8 : index
    %c0_56 = arith.constant 0 : index
    %72 = vector.load %arg8[%c8_55, %c0_56] : memref<18x128xf32, #tpu.memory_space<vmem>>, vector<8x64xf32>
    tpu.vector_store %arg8[%c8_55, %c0_56], %71 {strides = array<i32>} : memref<18x128xf32, #tpu.memory_space<vmem>>, vector<8x64xf32>,
    %73 = vector.extract_strided_slice %68 {offsets = [0, 0], sizes = [8, 64], strides = [1, 1]} : vector<8x128xf32> to vector<8x64xf32>
    %c8_57 = arith.constant 8 : index
    %c64_58 = arith.constant 64 : index
    %74 = vector.load %arg8[%c8_57, %c64_58] : memref<18x128xf32, #tpu.memory_space<vmem>>, vector<8x64xf32>
    tpu.vector_store %arg8[%c8_57, %c64_58], %73 {strides = array<i32>} : memref<18x128xf32, #tpu.memory_space<vmem>>, vector<8x64xf32>,
    %c16_59 = arith.constant 16 : index
    %c0_60 = arith.constant 0 : index
    %75 = vector.load %arg8[%c16_59, %c0_60] : memref<18x128xf32, #tpu.memory_space<vmem>>, vector<2x64xf32>
    tpu.vector_store %arg8[%c16_59, %c0_60], %61 {strides = array<i32>} : memref<18x128xf32, #tpu.memory_space<vmem>>, vector<2x64xf32>,
    %c0_61 = arith.constant 0 : index
    %c0_62 = arith.constant 0 : index
    %76 = vector.load %arg8[%c0_61, %c0_62] : memref<18x128xf32, #tpu.memory_space<vmem>>, vector<18x128xf32>
    %cst_63 = arith.constant dense<0.000000e+00> : vector<64x128xf32>
    %77 = tpu.matmul %0, %76, %cst_63 {dimension_numbers = #tpu.dot_dimension_numbers<[1], [0], [0], [1], [0, 0, 1, 1], [], []>} : vector<64x18xf32>, vector<18x128xf32>, vector<64x128xf32> -> vector<64x128xf32>
    %78 = vector.extract_strided_slice %77 {offsets = [0, 64], sizes = [64, 64], strides = [1, 1]} : vector<64x128xf32> to vector<64x64xf32>
    %79 = vector.extract_strided_slice %77 {offsets = [0, 0], sizes = [64, 64], strides = [1, 1]} : vector<64x128xf32> to vector<64x64xf32>
    %cst_64 = arith.constant 0.000000e+00 : f32
    %80 = vector.broadcast %cst_64 : f32 to vector<64x64xf32>
    %81 = arith.cmpf ogt, %79, %80 : vector<64x64xf32>
    %cst_65 = arith.constant 2.000000e-01 : f32
    %82 = vector.broadcast %cst_65 : f32 to vector<64x64xf32>
    %83 = arith.mulf %82, %79 : vector<64x64xf32>
    %84 = arith.select %81, %79, %83 : vector<64x64xi1>, vector<64x64xf32>
    %cst_66 = arith.constant dense<0.000000e+00> : vector<64x2xf32>
    %85 = tpu.matmul %84, %62, %cst_66 {dimension_numbers = #tpu.dot_dimension_numbers<[1], [0], [0], [1], [0, 0, 1, 1], [], []>} : vector<64x64xf32>, vector<64x2xf32>, vector<64x2xf32> -> vector<64x2xf32>
    %cst_67 = arith.constant 0.000000e+00 : f32
    %86 = vector.broadcast %cst_67 : f32 to vector<64x2xf32>
    %87 = arith.cmpf ogt, %65, %86 : vector<64x2xf32>
    %cst_68 = arith.constant -1.000000e+30 : f32
    %88 = vector.broadcast %cst_68 : f32 to vector<64x2xf32>
    %89 = arith.select %87, %85, %88 : vector<64x2xi1>, vector<64x2xf32>
    %cst_69 = arith.constant dense<0xFF800000> : vector<2xf32>
    %90 = vector.multi_reduction <maximumf>, %89, %cst_69 [0] : vector<64x2xf32> to vector<2xf32>
    %91 = vector.shape_cast %90 : vector<2xf32> to vector<1x2xf32>
    %92 = vector.broadcast %91 : vector<1x2xf32> to vector<64x2xf32>
    %93 = arith.subf %89, %92 : vector<64x2xf32>
    %94 = math.exp %93 : vector<64x2xf32>
    %95 = arith.mulf %94, %65 : vector<64x2xf32>
    %cst_70 = arith.constant dense<0.000000e+00> : vector<64x64xf32>
    %96 = tpu.matmul %95, %63, %cst_70 {dimension_numbers = #tpu.dot_dimension_numbers<[1], [0], [0], [1], [0, 0, 1, 1], [], []>} : vector<64x2xf32>, vector<2x64xf32>, vector<64x64xf32> -> vector<64x64xf32>
    %97 = arith.mulf %96, %78 : vector<64x64xf32>
    %c0_71 = arith.constant 0 : index
    %c0_72 = arith.constant 0 : index
    %98 = vector.load %arg9[%c0_71, %c0_72] : memref<64x68xf32, #tpu.memory_space<vmem>>, vector<64x64xf32>
    tpu.vector_store %arg9[%c0_71, %c0_72], %97 {strides = array<i32>} : memref<64x68xf32, #tpu.memory_space<vmem>>, vector<64x64xf32>,
    %c0_73 = arith.constant 0 : index
    %c64_74 = arith.constant 64 : index
    %99 = vector.load %arg9[%c0_73, %c64_74] : memref<64x68xf32, #tpu.memory_space<vmem>>, vector<64x2xf32>
    tpu.vector_store %arg9[%c0_73, %c64_74], %95 {strides = array<i32>} : memref<64x68xf32, #tpu.memory_space<vmem>>, vector<64x2xf32>,
    %c0_75 = arith.constant 0 : index
    %c0_76 = arith.constant 0 : index
    %100 = vector.load %arg9[%c0_75, %c0_76] : memref<64x68xf32, #tpu.memory_space<vmem>>, vector<64x66xf32>
    %cst_77 = arith.constant dense<0.000000e+00> : vector<8x66xf32>
    %101 = tpu.matmul %1, %100, %cst_77 {dimension_numbers = #tpu.dot_dimension_numbers<[1], [0], [0], [1], [0, 0, 1, 1], [], []>} : vector<8x64xf32>, vector<64x66xf32>, vector<8x66xf32> -> vector<8x66xf32>
    %102 = vector.extract_strided_slice %101 {offsets = [0, 0], sizes = [8, 64], strides = [1, 1]} : vector<8x66xf32> to vector<8x64xf32>
    %103 = vector.extract_strided_slice %101 {offsets = [0, 64], sizes = [8, 2], strides = [1, 1]} : vector<8x66xf32> to vector<8x2xf32>
    %cst_78 = arith.constant 9.99999968E-21 : f32
    %104 = vector.broadcast %cst_78 : f32 to vector<8x2xf32>
    %105 = arith.maximumf %103, %104 : vector<8x2xf32>
    %106 = tpu.reciprocal %105 {approx = true} : vector<8x2xf32> -> vector<8x2xf32>
    %cst_79 = arith.constant dense<0.000000e+00> : vector<8x64xf32>
    %107 = tpu.matmul %106, %63, %cst_79 {dimension_numbers = #tpu.dot_dimension_numbers<[1], [0], [0], [1], [0, 0, 1, 1], [], []>} : vector<8x2xf32>, vector<2x64xf32>, vector<8x64xf32> -> vector<8x64xf32>
    %108 = arith.mulf %102, %107 : vector<8x64xf32>
    %109 = vector.broadcast %64 : vector<1x64xf32> to vector<8x64xf32>
    %110 = arith.addf %108, %109 : vector<8x64xf32>
    %cst_80 = arith.constant 0.000000e+00 : f32
    %111 = vector.broadcast %cst_80 : f32 to vector<8x64xf32>
    %112 = arith.maximumf %110, %111 : vector<8x64xf32>
    %c0_81 = arith.constant 0 : index
    %c0_82 = arith.constant 0 : index
    %113 = vector.load %arg6[%c0_81, %c0_82] : memref<72x4xf32, #tpu.memory_space<vmem>>, vector<64x4xf32>
    %c64_83 = arith.constant 64 : index
    %c0_84 = arith.constant 0 : index
    %114 = vector.load %arg6[%c64_83, %c0_84] : memref<72x4xf32, #tpu.memory_space<vmem>>, vector<1x4xf32>
    %cst_85 = arith.constant dense<0.000000e+00> : vector<8x4xf32>
    %115 = tpu.matmul %112, %113, %cst_85 {dimension_numbers = #tpu.dot_dimension_numbers<[1], [0], [0], [1], [0, 0, 1, 1], [], []>} : vector<8x64xf32>, vector<64x4xf32>, vector<8x4xf32> -> vector<8x4xf32>
    %116 = vector.broadcast %114 : vector<1x4xf32> to vector<8x4xf32>
    %117 = arith.addf %115, %116 : vector<8x4xf32>
    %118 = math.tanh %117 : vector<8x4xf32>
    %c0_86 = arith.constant 0 : index
    %c0_87 = arith.constant 0 : index
    %119 = vector.load %arg7[%c0_86, %c0_87] : memref<8x4xf32, #tpu.memory_space<vmem>>, vector<8x4xf32>
    tpu.vector_store %arg7[%c0_86, %c0_87], %118 {strides = array<i32>} : memref<8x4xf32, #tpu.memory_space<vmem>>, vector<8x4xf32>,
    return
  }
}

</mosaic_0001>

<llo_original>
// kernel: _gnn_policy_forward.1
$region0: #{_gnn_policy_forward.1}
  #allocation0 [shape = 'u32[]', space=smem, size = 0x4, offset = 0x4, fixed_abs, tag = 'smem constant byte address 0x4 - core index']
  #allocation1 [shape = 'u32[72,128]{1,0:T(1,128)}', space=vmem, size = 0x9000, scoped, tag = 'internal scratch']
  #allocation2 [shape = 'f32[18,128]{1,0:T(8,128)}', space=vmem, size = 0x3000, scoped, tag = 'scratch operand']
  #allocation3 [shape = 'f32[64,68]{1,0:T(8,128)}', space=vmem, size = 0x8000, scoped, tag = 'scratch operand']
  %s0 = inlined_call_operand.vmem [shape: f32[8,8], index: 0, kind: input, shape index: {}]
  %s1 = inlined_call_operand.vmem [shape: f32[64,18], index: 1, kind: input, shape index: {}]
  %s2 = inlined_call_operand.vmem [shape: f32[8,64], index: 2, kind: input, shape index: {}]
  %s3 = inlined_call_operand.vmem [shape: f32[64,4], index: 3, kind: input, shape index: {}]
  %s4 = inlined_call_operand.vmem [shape: f32[104,128], index: 4, kind: input, shape index: {}]
  %s5 = inlined_call_operand.vmem [shape: f32[160,128], index: 5, kind: input, shape index: {}]
  %s6 = inlined_call_operand.vmem [shape: f32[72,4], index: 6, kind: input, shape index: {}]
  %s7 = inlined_call_operand.vmem [shape: f32[8,4], index: 7, kind: output, shape index: {}]
  %s8 = sld [smem:[#allocation0]]
  $region38: #{_gnn_policy_forward.1} parent=0
    _
  %s10 = ssub.s32 1, %s8
  %s11 = scalar_select 0, %s10, %s8
  // Predicated region
  $region2: #{_gnn_policy_forward.1} parent=0 // pred_check
    _
  $region3: #{_gnn_policy_forward.1} parent=0 // pred_check_branch
    %13 = sbr.rel (0) target = $region5
  $region4: #{_gnn_policy_forward.1} parent=0 // pred_region
    _
  $region5: #{_gnn_policy_forward.1} parent=0 // pred_fallthru
    _
  // Predicated region
  $region6: #{_gnn_policy_forward.1} parent=0 // pred_check
    _
  $region7: #{_gnn_policy_forward.1} parent=0 // pred_check_branch
    %15 = sbr.rel (0) target = $region9
  $region8: #{_gnn_policy_forward.1} parent=0 // pred_region
    _
  $region9: #{_gnn_policy_forward.1} parent=0 // pred_fallthru
    _
  // Predicated region
  $region10: #{_gnn_policy_forward.1} parent=0 // pred_check
    _
  $region11: #{_gnn_policy_forward.1} parent=0 // pred_check_branch
    %17 = sbr.rel (0) target = $region13
  $region12: #{_gnn_policy_forward.1} parent=0 // pred_region
    _
  $region13: #{_gnn_policy_forward.1} parent=0 // pred_fallthru
    _
  // Predicated region
  $region14: #{_gnn_policy_forward.1} parent=0 // pred_check
    _
  $region15: #{_gnn_policy_forward.1} parent=0 // pred_check_branch
    %19 = sbr.rel (0) target = $region17
  $region16: #{_gnn_policy_forward.1} parent=0 // pred_region
    _
  $region17: #{_gnn_policy_forward.1} parent=0 // pred_fallthru
    _
  // Predicated region
  $region18: #{_gnn_policy_forward.1} parent=0 // pred_check
    _
  $region19: #{_gnn_policy_forward.1} parent=0 // pred_check_branch
    %21 = sbr.rel (0) target = $region21
  $region20: #{_gnn_policy_forward.1} parent=0 // pred_region
    _
  $region21: #{_gnn_policy_forward.1} parent=0 // pred_fallthru
    _
  // Predicated region
  $region22: #{_gnn_policy_forward.1} parent=0 // pred_check
    _
  $region23: #{_gnn_policy_forward.1} parent=0 // pred_check_branch
    %23 = sbr.rel (0) target = $region25
  $region24: #{_gnn_policy_forward.1} parent=0 // pred_region
    _
  $region25: #{_gnn_policy_forward.1} parent=0 // pred_fallthru
    _
  // Predicated region
  $region26: #{_gnn_policy_forward.1} parent=0 // pred_check
    _
  $region27: #{_gnn_policy_forward.1} parent=0 // pred_check_branch
    %25 = sbr.rel (0) target = $region29
  $region28: #{_gnn_policy_forward.1} parent=0 // pred_region
    _
  $region29: #{_gnn_policy_forward.1} parent=0 // pred_fallthru
    _
  %v26 = vld [vmem:[%s1] sm:$0xff]
  %v27 = vld [vmem:[%s1 + $0x8] sm:$0xff]
  %v28 = vld [vmem:[%s1 + $0x10] sm:$0xff]
  %v29 = vld [vmem:[%s1 + $0x18] sm:$0xff]
  %v30 = vld [vmem:[%s1 + $0x20] sm:$0xff]
  %v31 = vld [vmem:[%s1 + $0x28] sm:$0xff]
  %v32 = vld [vmem:[%s1 + $0x30] sm:$0xff]
  %v33 = vld [vmem:[%s1 + $0x38] sm:$0xff]
  %v34 = vld [vmem:[%s2] sm:$0xff]
  %v35 = vld [vmem:[%s3] sm:$0xff]
  %v36 = vld [vmem:[%s3 + $0x8] sm:$0xff]
  %v37 = vld [vmem:[%s3 + $0x10] sm:$0xff]
  %v38 = vld [vmem:[%s3 + $0x18] sm:$0xff]
  %v39 = vld [vmem:[%s3 + $0x20] sm:$0xff]
  %v40 = vld [vmem:[%s3 + $0x28] sm:$0xff]
  %v41 = vld [vmem:[%s3 + $0x30] sm:$0xff]
  %v42 = vld [vmem:[%s3 + $0x38] sm:$0xff]
  %43 = vst [vmem:[#allocation2] sm:$0xff] 0.0
  %44 = vst [vmem:[#allocation2 + $0x8] sm:$0xff] 0.0
  %45 = vst [vmem:[#allocation2 + $0x10] sm:$0x3] 0.0
  %v46 = vld [vmem:[%s0] sm:$0xff]
  %v47 = vld [vmem:[%s4] sm:$0xff]
  %v48 = vld [vmem:[%s4 + $0x8] sm:$0x1]
  %v49 = vld [vmem:[%s4 + $0x10] sm:$0x3]
  %v50 = vld [vmem:[%s4 + $0x18] sm:$0xff]
  %v51 = vld [vmem:[%s4 + $0x20] sm:$0xff]
  %v52 = vld [vmem:[%s4 + $0x28] sm:$0xff]
  %v53 = vld [vmem:[%s4 + $0x30] sm:$0xff]
  %v54 = vld [vmem:[%s4 + $0x38] sm:$0xff]
  %v55 = vld [vmem:[%s4 + $0x40] sm:$0xff]
  %v56 = vld [vmem:[%s4 + $0x48] sm:$0xff]
  %v57 = vld [vmem:[%s4 + $0x50] sm:$0xff]
  %v58 = vld [vmem:[%s4 + $0x58] sm:$0xf]
  %v59 = vld [vmem:[%s4 + $0x60] sm:$0x1]
  %v60 = vperm.slane %v48, 0
  %vm61 = vcmask 64512
  %v63 = vsel %vm61, %v46, 0
  %65 = vmatpush.msra.mxu0 0.0
  %66 = vmatpush.msra.mxu0 0.0
  %67 = vmatpush.msra.mxu0 0.0
  %68 = vmatpush.msra.mxu0 0.0
  %69 = vmatpush.msra.mxu0 0.0
  %70 = vmatpush.msra.mxu0 0.0
  %71 = vmatpush.msra.mxu0 0.0
  %72 = vmatpush.msra.mxu0 0.0
  %73 = vmatpush.msra.mxu0 0.0
  %74 = vmatpush.msra.mxu0 0.0
  %75 = vmatpush.msra.mxu0 0.0
  %76 = vmatpush.msra.mxu0 0.0
  %77 = vmatpush.msra.mxu0 0.0
  %78 = vmatpush.msra.mxu0 0.0
  %79 = vmatpush.msra.mxu0 0.0
  %80 = vmatpush.msra.mxu0 %v47
  %81 = vmatmul.f32.gmra.mxu0 %v63
  %v82 = vpop.f32.mrf.mxu0
  %v83 = vadd.f32 %v60, %v82
  %84 = vdwg.mxu0
  %86 = vrot.lane.b32.xlu0 %v83, 64
  %v87 = vpop.permute.xlu0 %86
  %vm89 = vcmask 523264
  %90 = vst.msk [vmem:[#allocation2] sm:$0xff] %vm89, %v87
  %91 = vst.msk [vmem:[#allocation2 + $0x8] sm:$0xff] %vm89, %v83
  %vm92 = vcmask 1048064
  %93 = vst.msk [vmem:[#allocation2 + $0x8] sm:$0xff] %vm92, %v87
  %vm94 = vcmask 517120
  %95 = vst.msk [vmem:[#allocation2 + $0x10] sm:$0x3] %vm94, %v49
  %v96 = vld [vmem:[#allocation2] sm:$0xff]
  %v97 = vld [vmem:[#allocation2 + $0x8] sm:$0xff]
  %v98 = vld [vmem:[#allocation2 + $0x10] sm:$0x3]
  %vm99 = vcmask 146432
  %v101 = vsel %vm99, %v26, 0
  %v104 = vsel %vm99, %v27, 0
  %v107 = vsel %vm99, %v28, 0
  %v110 = vsel %vm99, %v29, 0
  %v113 = vsel %vm99, %v30, 0
  %v116 = vsel %vm99, %v31, 0
  %v119 = vsel %vm99, %v32, 0
  %v122 = vsel %vm99, %v33, 0
  %vm124 = vcmask 1041408
  %v126 = vsel %vm124, %v98, 0
  %128 = vmatpush.msra.mxu0 0.0
  %129 = vmatpush.msra.mxu0 0.0
  %130 = vmatpush.msra.mxu0 0.0
  %131 = vmatpush.msra.mxu0 0.0
  %132 = vmatpush.msra.mxu0 0.0
  %133 = vmatpush.msra.mxu0 0.0
  %134 = vmatpush.msra.mxu0 0.0
  %135 = vmatpush.msra.mxu0 0.0
  %136 = vmatpush.msra.mxu0 0.0
  %137 = vmatpush.msra.mxu0 0.0
  %138 = vmatpush.msra.mxu0 0.0
  %139 = vmatpush.msra.mxu0 0.0
  %140 = vmatpush.msra.mxu0 0.0
  %141 = vmatpush.msra.mxu0 %v126
  %142 = vmatpush.msra.mxu0 %v97
  %143 = vmatpush.msra.mxu0 %v96
  %144 = vmatmul.f32.gmra.mxu0 %v101
  %v145 = vpop.f32.mrf.mxu0
  %v146 = vadd.f32 0.0, %v145
  %147 = vmatmul.f32.gmra.mxu0 %v104
  %v148 = vpop.f32.mrf.mxu0
  %v149 = vadd.f32 0.0, %v148
  %150 = vmatmul.f32.gmra.mxu0 %v107
  %v151 = vpop.f32.mrf.mxu0
  %v152 = vadd.f32 0.0, %v151
  %153 = vmatmul.f32.gmra.mxu0 %v110
  %v154 = vpop.f32.mrf.mxu0
  %v155 = vadd.f32 0.0, %v154
  %156 = vmatmul.f32.gmra.mxu0 %v113
  %v157 = vpop.f32.mrf.mxu0
  %v158 = vadd.f32 0.0, %v157
  %159 = vmatmul.f32.gmra.mxu0 %v116
  %v160 = vpop.f32.mrf.mxu0
  %v161 = vadd.f32 0.0, %v160
  %162 = vmatmul.f32.gmra.mxu0 %v119
  %v163 = vpop.f32.mrf.mxu0
  %v164 = vadd.f32 0.0, %v163
  %165 = vmatmul.f32.gmra.mxu0 %v122
  %v166 = vpop.f32.mrf.mxu0
  %v167 = vadd.f32 0.0, %v166
  %168 = vdwg.mxu0
  %vm169 = vcmp.gt.f32.partialorder %v146, 0.0
  %vm170 = vcmp.gt.f32.partialorder %v149, 0.0
  %vm171 = vcmp.gt.f32.partialorder %v152, 0.0
  %vm172 = vcmp.gt.f32.partialorder %v155, 0.0
  %vm173 = vcmp.gt.f32.partialorder %v158, 0.0
  %vm174 = vcmp.gt.f32.partialorder %v161, 0.0
  %vm175 = vcmp.gt.f32.partialorder %v164, 0.0
  %vm176 = vcmp.gt.f32.partialorder %v167, 0.0
  %v177 = vmul.f32 %v146, 0.2
  %v178 = vmul.f32 %v149, 0.2
  %v179 = vmul.f32 %v152, 0.2
  %v180 = vmul.f32 %v155, 0.2
  %v181 = vmul.f32 %v158, 0.2
  %v182 = vmul.f32 %v161, 0.2
  %v183 = vmul.f32 %v164, 0.2
  %v184 = vmul.f32 %v167, 0.2
  %v185 = vsel %vm169, %v146, %v177
  %v186 = vsel %vm170, %v149, %v178
  %v187 = vsel %vm171, %v152, %v179
  %v188 = vsel %vm172, %v155, %v180
  %v189 = vsel %vm173, %v158, %v181
  %v190 = vsel %vm174, %v161, %v182
  %v191 = vsel %vm175, %v164, %v183
  %v192 = vsel %vm176, %v167, %v184
  %v194 = vsel %vm89, %v185, 0
  %v197 = vsel %vm89, %v186, 0
  %v200 = vsel %vm89, %v187, 0
  %v203 = vsel %vm89, %v188, 0
  %v206 = vsel %vm89, %v189, 0
  %v209 = vsel %vm89, %v190, 0
  %v212 = vsel %vm89, %v191, 0
  %v215 = vsel %vm89, %v192, 0
  %217 = vmatpush.msra.mxu0 0.0
  %218 = vmatpush.msra.mxu0 0.0
  %219 = vmatpush.msra.mxu0 0.0
  %220 = vmatpush.msra.mxu0 0.0
  %221 = vmatpush.msra.mxu0 0.0
  %222 = vmatpush.msra.mxu0 0.0
  %223 = vmatpush.msra.mxu0 0.0
  %224 = vmatpush.msra.mxu0 0.0
  %225 = vmatpush.msra.mxu0 %v57
  %226 = vmatpush.msra.mxu0 %v56
  %227 = vmatpush.msra.mxu0 %v55
  %228 = vmatpush.msra.mxu0 %v54
  %229 = vmatpush.msra.mxu0 %v53
  %230 = vmatpush.msra.mxu0 %v52
  %231 = vmatpush.msra.mxu0 %v51
  %232 = vmatpush.msra.mxu0 %v50
  %233 = vmatmul.f32.gmra.mxu0 %v194
  %v234 = vpop.f32.mrf.mxu0
  %v235 = vadd.f32 0.0, %v234
  %236 = vmatmul.f32.gmra.mxu0 %v197
  %v237 = vpop.f32.mrf.mxu0
  %v238 = vadd.f32 0.0, %v237
  %239 = vmatmul.f32.gmra.mxu0 %v200
  %v240 = vpop.f32.mrf.mxu0
  %v241 = vadd.f32 0.0, %v240
  %242 = vmatmul.f32.gmra.mxu0 %v203
  %v243 = vpop.f32.mrf.mxu0
  %v244 = vadd.f32 0.0, %v243
  %245 = vmatmul.f32.gmra.mxu0 %v206
  %v246 = vpop.f32.mrf.mxu0
  %v247 = vadd.f32 0.0, %v246
  %248 = vmatmul.f32.gmra.mxu0 %v209
  %v249 = vpop.f32.mrf.mxu0
  %v250 = vadd.f32 0.0, %v249
  %251 = vmatmul.f32.gmra.mxu0 %v212
  %v252 = vpop.f32.mrf.mxu0
  %v253 = vadd.f32 0.0, %v252
  %254 = vmatmul.f32.gmra.mxu0 %v215
  %v255 = vpop.f32.mrf.mxu0
  %v256 = vadd.f32 0.0, %v255
  %257 = vdwg.mxu0
  %vm258 = vcmp.gt.f32.partialorder %v35, 0.0
  %vm259 = vcmp.gt.f32.partialorder %v36, 0.0
  %vm260 = vcmp.gt.f32.partialorder %v37, 0.0
  %vm261 = vcmp.gt.f32.partialorder %v38, 0.0
  %vm262 = vcmp.gt.f32.partialorder %v39, 0.0
  %vm263 = vcmp.gt.f32.partialorder %v40, 0.0
  %vm264 = vcmp.gt.f32.partialorder %v41, 0.0
  %vm265 = vcmp.gt.f32.partialorder %v42, 0.0
  %v266 = vsel %vm258, %v235, -1e+30
  %v267 = vsel %vm259, %v238, -1e+30
  %v268 = vsel %vm260, %v241, -1e+30
  %v269 = vsel %vm261, %v244, -1e+30
  %v270 = vsel %vm262, %v247, -1e+30
  %v271 = vsel %vm263, %v250, -1e+30
  %v272 = vsel %vm264, %v253, -1e+30
  %v273 = vsel %vm265, %v256, -1e+30
  %vm274 = vcmask 31744
  %v275 = vsel %vm274, %v266, -inf
  %v276 = vsel %vm274, %v267, -inf
  %v277 = vsel %vm274, %v268, -inf
  %v278 = vsel %vm274, %v269, -inf
  %v279 = vsel %vm274, %v270, -inf
  %v280 = vmax.f32 %v275, %v279
  %v281 = vsel %vm274, %v271, -inf
  %v282 = vmax.f32 %v276, %v281
  %v283 = vsel %vm274, %v272, -inf
  %v284 = vmax.f32 %v277, %v283
  %v285 = vsel %vm274, %v273, -inf
  %v286 = vmax.f32 %v278, %v285
  %v287 = vmax.f32 %v280, %v282
  %v288 = vmax.f32 %v284, %v286
  %v289 = vmax.f32 %v287, %v288
  %v290 = vrot.slane %v289, 4
  %v291 = vmax.f32 %v289, %v290
  %v292 = vrot.slane %v291, 2
  %v293 = vmax.f32 %v291, %v292
  %v294 = vrot.slane %v293, 1
  %v295 = vmax.f32 %v293, %v294
  %v296 = vsub.f32 %v266, %v295
  %v297 = vsub.f32 %v267, %v295
  %v298 = vsub.f32 %v268, %v295
  %v299 = vsub.f32 %v269, %v295
  %v300 = vsub.f32 %v270, %v295
  %v301 = vsub.f32 %v271, %v295
  %v302 = vsub.f32 %v272, %v295
  %v303 = vsub.f32 %v273, %v295
  %v304 = vmul.f32 %v296, 1.442695
  %v305 = vpow.pop %v304
  %v306 = vmul.f32 %v297, 1.442695
  %v307 = vpow.pop %v306
  %v308 = vmul.f32 %v298, 1.442695
  %v309 = vpow.pop %v308
  %v310 = vmul.f32 %v299, 1.442695
  %v311 = vpow.pop %v310
  %v312 = vmul.f32 %v300, 1.442695
  %v313 = vpow.pop %v312
  %v314 = vmul.f32 %v301, 1.442695
  %v315 = vpow.pop %v314
  %v316 = vmul.f32 %v302, 1.442695
  %v317 = vpow.pop %v316
  %v318 = vmul.f32 %v303, 1.442695
  %v319 = vpow.pop %v318
  %v320 = vmul.f32 %v305, %v35
  %v321 = vmul.f32 %v307, %v36
  %v322 = vmul.f32 %v309, %v37
  %v323 = vmul.f32 %v311, %v38
  %v324 = vmul.f32 %v313, %v39
  %v325 = vmul.f32 %v315, %v40
  %v326 = vmul.f32 %v317, %v41
  %v327 = vmul.f32 %v319, %v42
  %v329 = vsel %vm274, %v320, 0
  %v332 = vsel %vm274, %v321, 0
  %v335 = vsel %vm274, %v322, 0
  %v338 = vsel %vm274, %v323, 0
  %v341 = vsel %vm274, %v324, 0
  %v344 = vsel %vm274, %v325, 0
  %v347 = vsel %vm274, %v326, 0
  %v350 = vsel %vm274, %v327, 0
  %vm352 = vcmask 1043456
  %v354 = vsel %vm352, %v58, 0
  %356 = vmatpush.msra.mxu0 0.0
  %357 = vmatpush.msra.mxu0 0.0
  %358 = vmatpush.msra.mxu0 0.0
  %359 = vmatpush.msra.mxu0 0.0
  %360 = vmatpush.msra.mxu0 0.0
  %361 = vmatpush.msra.mxu0 0.0
  %362 = vmatpush.msra.mxu0 0.0
  %363 = vmatpush.msra.mxu0 0.0
  %364 = vmatpush.msra.mxu0 0.0
  %365 = vmatpush.msra.mxu0 0.0
  %366 = vmatpush.msra.mxu0 0.0
  %367 = vmatpush.msra.mxu0 0.0
  %368 = vmatpush.msra.mxu0 0.0
  %369 = vmatpush.msra.mxu0 0.0
  %370 = vmatpush.msra.mxu0 0.0
  %371 = vmatpush.msra.mxu0 %v354
  %372 = vmatmul.f32.gmra.mxu0 %v329
  %v373 = vpop.f32.mrf.mxu0
  %v374 = vadd.f32 0.0, %v373
  %375 = vmatmul.f32.gmra.mxu0 %v332
  %v376 = vpop.f32.mrf.mxu0
  %v377 = vadd.f32 0.0, %v376
  %378 = vmatmul.f32.gmra.mxu0 %v335
  %v379 = vpop.f32.mrf.mxu0
  %v380 = vadd.f32 0.0, %v379
  %381 = vmatmul.f32.gmra.mxu0 %v338
  %v382 = vpop.f32.mrf.mxu0
  %v383 = vadd.f32 0.0, %v382
  %384 = vmatmul.f32.gmra.mxu0 %v341
  %v385 = vpop.f32.mrf.mxu0
  %v386 = vadd.f32 0.0, %v385
  %387 = vmatmul.f32.gmra.mxu0 %v344
  %v388 = vpop.f32.mrf.mxu0
  %v389 = vadd.f32 0.0, %v388
  %390 = vmatmul.f32.gmra.mxu0 %v347
  %v391 = vpop.f32.mrf.mxu0
  %v392 = vadd.f32 0.0, %v391
  %393 = vmatmul.f32.gmra.mxu0 %v350
  %v394 = vpop.f32.mrf.mxu0
  %v395 = vadd.f32 0.0, %v394
  %396 = vdwg.mxu0
  %405 = vrot.lane.b32.xlu0 %v146, 64
  %v406 = vpop.permute.xlu0 %405
  %407 = vrot.lane.b32.xlu0 %v149, 64
  %v408 = vpop.permute.xlu0 %407
  %409 = vrot.lane.b32.xlu0 %v152, 64
  %v410 = vpop.permute.xlu0 %409
  %411 = vrot.lane.b32.xlu0 %v155, 64
  %v412 = vpop.permute.xlu0 %411
  %413 = vrot.lane.b32.xlu0 %v158, 64
  %v414 = vpop.permute.xlu0 %413
  %415 = vrot.lane.b32.xlu0 %v161, 64
  %v416 = vpop.permute.xlu0 %415
  %417 = vrot.lane.b32.xlu0 %v164, 64
  %v418 = vpop.permute.xlu0 %417
  %419 = vrot.lane.b32.xlu0 %v167, 64
  %v420 = vpop.permute.xlu0 %419
  %v429 = vmul.f32 %v374, %v406
  %v430 = vmul.f32 %v377, %v408
  %v431 = vmul.f32 %v380, %v410
  %v432 = vmul.f32 %v383, %v412
  %v433 = vmul.f32 %v386, %v414
  %v434 = vmul.f32 %v389, %v416
  %v435 = vmul.f32 %v392, %v418
  %v436 = vmul.f32 %v395, %v420
  %437 = vst.msk [vmem:[#allocation3] sm:$0xff] %vm89, %v429
  %438 = vst.msk [vmem:[#allocation3 + $0x8] sm:$0xff] %vm89, %v430
  %439 = vst.msk [vmem:[#allocation3 + $0x10] sm:$0xff] %vm89, %v431
  %440 = vst.msk [vmem:[#allocation3 + $0x18] sm:$0xff] %vm89, %v432
  %441 = vst.msk [vmem:[#allocation3 + $0x20] sm:$0xff] %vm89, %v433
  %442 = vst.msk [vmem:[#allocation3 + $0x28] sm:$0xff] %vm89, %v434
  %443 = vst.msk [vmem:[#allocation3 + $0x30] sm:$0xff] %vm89, %v435
  %444 = vst.msk [vmem:[#allocation3 + $0x38] sm:$0xff] %vm89, %v436
  %445 = vrot.lane.b32.xlu0 %v320, 64
  %v446 = vpop.permute.xlu0 %445
  %447 = vrot.lane.b32.xlu0 %v321, 64
  %v448 = vpop.permute.xlu0 %447
  %449 = vrot.lane.b32.xlu0 %v322, 64
  %v450 = vpop.permute.xlu0 %449
  %451 = vrot.lane.b32.xlu0 %v323, 64
  %v452 = vpop.permute.xlu0 %451
  %453 = vrot.lane.b32.xlu0 %v324, 64
  %v454 = vpop.permute.xlu0 %453
  %455 = vrot.lane.b32.xlu0 %v325, 64
  %v456 = vpop.permute.xlu0 %455
  %457 = vrot.lane.b32.xlu0 %v326, 64
  %v458 = vpop.permute.xlu0 %457
  %459 = vrot.lane.b32.xlu0 %v327, 64
  %v460 = vpop.permute.xlu0 %459
  %vm469 = vcmask 556544
  %470 = vst.msk [vmem:[#allocation3] sm:$0xff] %vm469, %v446
  %471 = vst.msk [vmem:[#allocation3 + $0x8] sm:$0xff] %vm469, %v448
  %472 = vst.msk [vmem:[#allocation3 + $0x10] sm:$0xff] %vm469, %v450
  %473 = vst.msk [vmem:[#allocation3 + $0x18] sm:$0xff] %vm469, %v452
  %474 = vst.msk [vmem:[#allocation3 + $0x20] sm:$0xff] %vm469, %v454
  %475 = vst.msk [vmem:[#allocation3 + $0x28] sm:$0xff] %vm469, %v456
  %476 = vst.msk [vmem:[#allocation3 + $0x30] sm:$0xff] %vm469, %v458
  %477 = vst.msk [vmem:[#allocation3 + $0x38] sm:$0xff] %vm469, %v460
  %v478 = vld [vmem:[#allocation3] sm:$0xff]
  %v479 = vld [vmem:[#allocation3 + $0x8] sm:$0xff]
  %v480 = vld [vmem:[#allocation3 + $0x10] sm:$0xff]
  %v481 = vld [vmem:[#allocation3 + $0x18] sm:$0xff]
  %v482 = vld [vmem:[#allocation3 + $0x20] sm:$0xff]
  %v483 = vld [vmem:[#allocation3 + $0x28] sm:$0xff]
  %v484 = vld [vmem:[#allocation3 + $0x30] sm:$0xff]
  %v485 = vld [vmem:[#allocation3 + $0x38] sm:$0xff]
  %v487 = vsel %vm89, %v34, 0
  %489 = vmatpush.msra.mxu0 0.0
  %490 = vmatpush.msra.mxu0 0.0
  %491 = vmatpush.msra.mxu0 0.0
  %492 = vmatpush.msra.mxu0 0.0
  %493 = vmatpush.msra.mxu0 0.0
  %494 = vmatpush.msra.mxu0 0.0
  %495 = vmatpush.msra.mxu0 0.0
  %496 = vmatpush.msra.mxu0 0.0
  %497 = vmatpush.msra.mxu0 %v485
  %498 = vmatpush.msra.mxu0 %v484
  %499 = vmatpush.msra.mxu0 %v483
  %500 = vmatpush.msra.mxu0 %v482
  %501 = vmatpush.msra.mxu0 %v481
  %502 = vmatpush.msra.mxu0 %v480
  %503 = vmatpush.msra.mxu0 %v479
  %504 = vmatpush.msra.mxu0 %v478
  %505 = vmatmul.f32.gmra.mxu0 %v487
  %v506 = vpop.f32.mrf.mxu0
  %v507 = vadd.f32 0.0, %v506
  %508 = vdwg.mxu0
  %v509 = vmax.f32 %v507, 1e-20
  %v510 = vrcp.pop %v509
  %512 = vrot.lane.b32.xlu0 %v510, 64
  %v513 = vpop.permute.xlu0 %512
  %v514 = vsel %vm274, %v513, 0
  %516 = vmatpush.msra.mxu0 0.0
  %517 = vmatpush.msra.mxu0 0.0
  %518 = vmatpush.msra.mxu0 0.0
  %519 = vmatpush.msra.mxu0 0.0
  %520 = vmatpush.msra.mxu0 0.0
  %521 = vmatpush.msra.mxu0 0.0
  %522 = vmatpush.msra.mxu0 0.0
  %523 = vmatpush.msra.mxu0 0.0
  %524 = vmatpush.msra.mxu0 0.0
  %525 = vmatpush.msra.mxu0 0.0
  %526 = vmatpush.msra.mxu0 0.0
  %527 = vmatpush.msra.mxu0 0.0
  %528 = vmatpush.msra.mxu0 0.0
  %529 = vmatpush.msra.mxu0 0.0
  %530 = vmatpush.msra.mxu0 0.0
  %531 = vmatpush.msra.mxu0 %v354
  %532 = vmatmul.f32.gmra.mxu0 %v514
  %v533 = vpop.f32.mrf.mxu0
  %v534 = vadd.f32 0.0, %v533
  %535 = vdwg.mxu0
  %v536 = vmul.f32 %v507, %v534
  %v537 = vperm.slane %v59, 0
  %v538 = vadd.f32 %v536, %v537
  %v539 = vmax.f32 %v538, 0.0
  %v540 = vld [vmem:[%s5] sm:$0xff]
  %v541 = vld [vmem:[%s5 + $0x8] sm:$0xff]
  %v542 = vld [vmem:[%s5 + $0x10] sm:$0xff]
  %v543 = vld [vmem:[%s5 + $0x18] sm:$0xff]
  %v544 = vld [vmem:[%s5 + $0x20] sm:$0xff]
  %v545 = vld [vmem:[%s5 + $0x28] sm:$0xff]
  %v546 = vld [vmem:[%s5 + $0x30] sm:$0xff]
  %v547 = vld [vmem:[%s5 + $0x38] sm:$0xff]
  %v548 = vld [vmem:[%s5 + $0x40] sm:$0x1]
  %v549 = vld [vmem:[%s5 + $0x48] sm:$0x3]
  %v550 = vld [vmem:[%s5 + $0x50] sm:$0xff]
  %v551 = vld [vmem:[%s5 + $0x58] sm:$0xff]
  %v552 = vld [vmem:[%s5 + $0x60] sm:$0xff]
  %v553 = vld [vmem:[%s5 + $0x68] sm:$0xff]
  %v554 = vld [vmem:[%s5 + $0x70] sm:$0xff]
  %v555 = vld [vmem:[%s5 + $0x78] sm:$0xff]
  %v556 = vld [vmem:[%s5 + $0x80] sm:$0xff]
  %v557 = vld [vmem:[%s5 + $0x88] sm:$0xff]
  %v558 = vld [vmem:[%s5 + $0x90] sm:$0x3]
  %v559 = vld [vmem:[%s5 + $0x98] sm:$0x1]
  %v560 = vperm.slane %v548, 0
  %v562 = vsel %vm89, %v539, 0
  %564 = vmatpush.msra.mxu0 0.0
  %565 = vmatpush.msra.mxu0 0.0
  %566 = vmatpush.msra.mxu0 0.0
  %567 = vmatpush.msra.mxu0 0.0
  %568 = vmatpush.msra.mxu0 0.0
  %569 = vmatpush.msra.mxu0 0.0
  %570 = vmatpush.msra.mxu0 0.0
  %571 = vmatpush.msra.mxu0 0.0
  %572 = vmatpush.msra.mxu0 %v547
  %573 = vmatpush.msra.mxu0 %v546
  %574 = vmatpush.msra.mxu0 %v545
  %575 = vmatpush.msra.mxu0 %v544
  %576 = vmatpush.msra.mxu0 %v543
  %577 = vmatpush.msra.mxu0 %v542
  %578 = vmatpush.msra.mxu0 %v541
  %579 = vmatpush.msra.mxu0 %v540
  %580 = vmatmul.f32.gmra.mxu0 %v562
  %v581 = vpop.f32.mrf.mxu0
  %v582 = vadd.f32 %v560, %v581
  %583 = vdwg.mxu0
  %585 = vrot.lane.b32.xlu0 %v582, 64
  %v586 = vpop.permute.xlu0 %585
  %588 = vst.msk [vmem:[#allocation2] sm:$0xff] %vm89, %v586
  %589 = vst.msk [vmem:[#allocation2 + $0x8] sm:$0xff] %vm89, %v582
  %590 = vst.msk [vmem:[#allocation2 + $0x8] sm:$0xff] %vm92, %v586
  %591 = vst.msk [vmem:[#allocation2 + $0x10] sm:$0x3] %vm94, %v549
  %v592 = vld [vmem:[#allocation2] sm:$0xff]
  %v593 = vld [vmem:[#allocation2 + $0x8] sm:$0xff]
  %v594 = vld [vmem:[#allocation2 + $0x10] sm:$0x3]
  %v596 = vsel %vm124, %v594, 0
  %598 = vmatpush.msra.mxu0 0.0
  %599 = vmatpush.msra.mxu0 0.0
  %600 = vmatpush.msra.mxu0 0.0
  %601 = vmatpush.msra.mxu0 0.0
  %602 = vmatpush.msra.mxu0 0.0
  %603 = vmatpush.msra.mxu0 0.0
  %604 = vmatpush.msra.mxu0 0.0
  %605 = vmatpush.msra.mxu0 0.0
  %606 = vmatpush.msra.mxu0 0.0
  %607 = vmatpush.msra.mxu0 0.0
  %608 = vmatpush.msra.mxu0 0.0
  %609 = vmatpush.msra.mxu0 0.0
  %610 = vmatpush.msra.mxu0 0.0
  %611 = vmatpush.msra.mxu0 %v596
  %612 = vmatpush.msra.mxu0 %v593
  %613 = vmatpush.msra.mxu0 %v592
  %614 = vmatmul.f32.gmra.mxu0 %v101
  %v615 = vpop.f32.mrf.mxu0
  %v616 = vadd.f32 0.0, %v615
  %617 = vmatmul.f32.gmra.mxu0 %v104
  %v618 = vpop.f32.mrf.mxu0
  %v619 = vadd.f32 0.0, %v618
  %620 = vmatmul.f32.gmra.mxu0 %v107
  %v621 = vpop.f32.mrf.mxu0
  %v622 = vadd.f32 0.0, %v621
  %623 = vmatmul.f32.gmra.mxu0 %v110
  %v624 = vpop.f32.mrf.mxu0
  %v625 = vadd.f32 0.0, %v624
  %626 = vmatmul.f32.gmra.mxu0 %v113
  %v627 = vpop.f32.mrf.mxu0
  %v628 = vadd.f32 0.0, %v627
  %629 = vmatmul.f32.gmra.mxu0 %v116
  %v630 = vpop.f32.mrf.mxu0
  %v631 = vadd.f32 0.0, %v630
  %632 = vmatmul.f32.gmra.mxu0 %v119
  %v633 = vpop.f32.mrf.mxu0
  %v634 = vadd.f32 0.0, %v633
  %635 = vmatmul.f32.gmra.mxu0 %v122
  %v636 = vpop.f32.mrf.mxu0
  %v637 = vadd.f32 0.0, %v636
  %638 = vdwg.mxu0
  %vm639 = vcmp.gt.f32.partialorder %v616, 0.0
  %vm640 = vcmp.gt.f32.partialorder %v619, 0.0
  %vm641 = vcmp.gt.f32.partialorder %v622, 0.0
  %vm642 = vcmp.gt.f32.partialorder %v625, 0.0
  %vm643 = vcmp.gt.f32.partialorder %v628, 0.0
  %vm644 = vcmp.gt.f32.partialorder %v631, 0.0
  %vm645 = vcmp.gt.f32.partialorder %v634, 0.0
  %vm646 = vcmp.gt.f32.partialorder %v637, 0.0
  %v647 = vmul.f32 %v616, 0.2
  %v648 = vmul.f32 %v619, 0.2
  %v649 = vmul.f32 %v622, 0.2
  %v650 = vmul.f32 %v625, 0.2
  %v651 = vmul.f32 %v628, 0.2
  %v652 = vmul.f32 %v631, 0.2
  %v653 = vmul.f32 %v634, 0.2
  %v654 = vmul.f32 %v637, 0.2
  %v655 = vsel %vm639, %v616, %v647
  %v656 = vsel %vm640, %v619, %v648
  %v657 = vsel %vm641, %v622, %v649
  %v658 = vsel %vm642, %v625, %v650
  %v659 = vsel %vm643, %v628, %v651
  %v660 = vsel %vm644, %v631, %v652
  %v661 = vsel %vm645, %v634, %v653
  %v662 = vsel %vm646, %v637, %v654
  %v664 = vsel %vm89, %v655, 0
  %v667 = vsel %vm89, %v656, 0
  %v670 = vsel %vm89, %v657, 0
  %v673 = vsel %vm89, %v658, 0
  %v676 = vsel %vm89, %v659, 0
  %v679 = vsel %vm89, %v660, 0
  %v682 = vsel %vm89, %v661, 0
  %v685 = vsel %vm89, %v662, 0
  %687 = vmatpush.msra.mxu0 0.0
  %688 = vmatpush.msra.mxu0 0.0
  %689 = vmatpush.msra.mxu0 0.0
  %690 = vmatpush.msra.mxu0 0.0
  %691 = vmatpush.msra.mxu0 0.0
  %692 = vmatpush.msra.mxu0 0.0
  %693 = vmatpush.msra.mxu0 0.0
  %694 = vmatpush.msra.mxu0 0.0
  %695 = vmatpush.msra.mxu0 %v557
  %696 = vmatpush.msra.mxu0 %v556
  %697 = vmatpush.msra.mxu0 %v555
  %698 = vmatpush.msra.mxu0 %v554
  %699 = vmatpush.msra.mxu0 %v553
  %700 = vmatpush.msra.mxu0 %v552
  %701 = vmatpush.msra.mxu0 %v551
  %702 = vmatpush.msra.mxu0 %v550
  %703 = vmatmul.f32.gmra.mxu0 %v664
  %v704 = vpop.f32.mrf.mxu0
  %v705 = vadd.f32 0.0, %v704
  %706 = vmatmul.f32.gmra.mxu0 %v667
  %v707 = vpop.f32.mrf.mxu0
  %v708 = vadd.f32 0.0, %v707
  %709 = vmatmul.f32.gmra.mxu0 %v670
  %v710 = vpop.f32.mrf.mxu0
  %v711 = vadd.f32 0.0, %v710
  %712 = vmatmul.f32.gmra.mxu0 %v673
  %v713 = vpop.f32.mrf.mxu0
  %v714 = vadd.f32 0.0, %v713
  %715 = vmatmul.f32.gmra.mxu0 %v676
  %v716 = vpop.f32.mrf.mxu0
  %v717 = vadd.f32 0.0, %v716
  %718 = vmatmul.f32.gmra.mxu0 %v679
  %v719 = vpop.f32.mrf.mxu0
  %v720 = vadd.f32 0.0, %v719
  %721 = vmatmul.f32.gmra.mxu0 %v682
  %v722 = vpop.f32.mrf.mxu0
  %v723 = vadd.f32 0.0, %v722
  %724 = vmatmul.f32.gmra.mxu0 %v685
  %v725 = vpop.f32.mrf.mxu0
  %v726 = vadd.f32 0.0, %v725
  %727 = vdwg.mxu0
  %v728 = vsel %vm258, %v705, -1e+30
  %v729 = vsel %vm259, %v708, -1e+30
  %v730 = vsel %vm260, %v711, -1e+30
  %v731 = vsel %vm261, %v714, -1e+30
  %v732 = vsel %vm262, %v717, -1e+30
  %v733 = vsel %vm263, %v720, -1e+30
  %v734 = vsel %vm264, %v723, -1e+30
  %v735 = vsel %vm265, %v726, -1e+30
  %vm736 = vcmask 15360
  %v737 = vsel %vm736, %v728, -inf
  %v738 = vsel %vm736, %v729, -inf
  %v739 = vsel %vm736, %v730, -inf
  %v740 = vsel %vm736, %v731, -inf
  %v741 = vsel %vm736, %v732, -inf
  %v742 = vmax.f32 %v737, %v741
  %v743 = vsel %vm736, %v733, -inf
  %v744 = vmax.f32 %v738, %v743
  %v745 = vsel %vm736, %v734, -inf
  %v746 = vmax.f32 %v739, %v745
  %v747 = vsel %vm736, %v735, -inf
  %v748 = vmax.f32 %v740, %v747
  %v749 = vmax.f32 %v742, %v744
  %v750 = vmax.f32 %v746, %v748
  %v751 = vmax.f32 %v749, %v750
  %v752 = vrot.slane %v751, 4
  %v753 = vmax.f32 %v751, %v752
  %v754 = vrot.slane %v753, 2
  %v755 = vmax.f32 %v753, %v754
  %v756 = vrot.slane %v755, 1
  %v757 = vmax.f32 %v755, %v756
  %v758 = vsub.f32 %v728, %v757
  %v759 = vsub.f32 %v729, %v757
  %v760 = vsub.f32 %v730, %v757
  %v761 = vsub.f32 %v731, %v757
  %v762 = vsub.f32 %v732, %v757
  %v763 = vsub.f32 %v733, %v757
  %v764 = vsub.f32 %v734, %v757
  %v765 = vsub.f32 %v735, %v757
  %v766 = vmul.f32 %v758, 1.442695
  %v767 = vpow.pop %v766
  %v768 = vmul.f32 %v759, 1.442695
  %v769 = vpow.pop %v768
  %v770 = vmul.f32 %v760, 1.442695
  %v771 = vpow.pop %v770
  %v772 = vmul.f32 %v761, 1.442695
  %v773 = vpow.pop %v772
  %v774 = vmul.f32 %v762, 1.442695
  %v775 = vpow.pop %v774
  %v776 = vmul.f32 %v763, 1.442695
  %v777 = vpow.pop %v776
  %v778 = vmul.f32 %v764, 1.442695
  %v779 = vpow.pop %v778
  %v780 = vmul.f32 %v765, 1.442695
  %v781 = vpow.pop %v780
  %v782 = vmul.f32 %v767, %v35
  %v783 = vmul.f32 %v769, %v36
  %v784 = vmul.f32 %v771, %v37
  %v785 = vmul.f32 %v773, %v38
  %v786 = vmul.f32 %v775, %v39
  %v787 = vmul.f32 %v777, %v40
  %v788 = vmul.f32 %v779, %v41
  %v789 = vmul.f32 %v781, %v42
  %v791 = vsel %vm736, %v782, 0
  %v794 = vsel %vm736, %v783, 0
  %v797 = vsel %vm736, %v784, 0
  %v800 = vsel %vm736, %v785, 0
  %v803 = vsel %vm736, %v786, 0
  %v806 = vsel %vm736, %v787, 0
  %v809 = vsel %vm736, %v788, 0
  %v812 = vsel %vm736, %v789, 0
  %v815 = vsel %vm124, %v558, 0
  %817 = vmatpush.msra.mxu0 0.0
  %818 = vmatpush.msra.mxu0 0.0
  %819 = vmatpush.msra.mxu0 0.0
  %820 = vmatpush.msra.mxu0 0.0
  %821 = vmatpush.msra.mxu0 0.0
  %822 = vmatpush.msra.mxu0 0.0
  %823 = vmatpush.msra.mxu0 0.0
  %824 = vmatpush.msra.mxu0 0.0
  %825 = vmatpush.msra.mxu0 0.0
  %826 = vmatpush.msra.mxu0 0.0
  %827 = vmatpush.msra.mxu0 0.0
  %828 = vmatpush.msra.mxu0 0.0
  %829 = vmatpush.msra.mxu0 0.0
  %830 = vmatpush.msra.mxu0 0.0
  %831 = vmatpush.msra.mxu0 0.0
  %832 = vmatpush.msra.mxu0 %v815
  %833 = vmatmul.f32.gmra.mxu0 %v791
  %v834 = vpop.f32.mrf.mxu0
  %v835 = vadd.f32 0.0, %v834
  %836 = vmatmul.f32.gmra.mxu0 %v794
  %v837 = vpop.f32.mrf.mxu0
  %v838 = vadd.f32 0.0, %v837
  %839 = vmatmul.f32.gmra.mxu0 %v797
  %v840 = vpop.f32.mrf.mxu0
  %v841 = vadd.f32 0.0, %v840
  %842 = vmatmul.f32.gmra.mxu0 %v800
  %v843 = vpop.f32.mrf.mxu0
  %v844 = vadd.f32 0.0, %v843
  %845 = vmatmul.f32.gmra.mxu0 %v803
  %v846 = vpop.f32.mrf.mxu0
  %v847 = vadd.f32 0.0, %v846
  %848 = vmatmul.f32.gmra.mxu0 %v806
  %v849 = vpop.f32.mrf.mxu0
  %v850 = vadd.f32 0.0, %v849
  %851 = vmatmul.f32.gmra.mxu0 %v809
  %v852 = vpop.f32.mrf.mxu0
  %v853 = vadd.f32 0.0, %v852
  %854 = vmatmul.f32.gmra.mxu0 %v812
  %v855 = vpop.f32.mrf.mxu0
  %v856 = vadd.f32 0.0, %v855
  %857 = vdwg.mxu0
  %866 = vrot.lane.b32.xlu0 %v616, 64
  %v867 = vpop.permute.xlu0 %866
  %868 = vrot.lane.b32.xlu0 %v619, 64
  %v869 = vpop.permute.xlu0 %868
  %870 = vrot.lane.b32.xlu0 %v622, 64
  %v871 = vpop.permute.xlu0 %870
  %872 = vrot.lane.b32.xlu0 %v625, 64
  %v873 = vpop.permute.xlu0 %872
  %874 = vrot.lane.b32.xlu0 %v628, 64
  %v875 = vpop.permute.xlu0 %874
  %876 = vrot.lane.b32.xlu0 %v631, 64
  %v877 = vpop.permute.xlu0 %876
  %878 = vrot.lane.b32.xlu0 %v634, 64
  %v879 = vpop.permute.xlu0 %878
  %880 = vrot.lane.b32.xlu0 %v637, 64
  %v881 = vpop.permute.xlu0 %880
  %v890 = vmul.f32 %v835, %v867
  %v891 = vmul.f32 %v838, %v869
  %v892 = vmul.f32 %v841, %v871
  %v893 = vmul.f32 %v844, %v873
  %v894 = vmul.f32 %v847, %v875
  %v895 = vmul.f32 %v850, %v877
  %v896 = vmul.f32 %v853, %v879
  %v897 = vmul.f32 %v856, %v881
  %898 = vst.msk [vmem:[#allocation3] sm:$0xff] %vm89, %v890
  %899 = vst.msk [vmem:[#allocation3 + $0x8] sm:$0xff] %vm89, %v891
  %900 = vst.msk [vmem:[#allocation3 + $0x10] sm:$0xff] %vm89, %v892
  %901 = vst.msk [vmem:[#allocation3 + $0x18] sm:$0xff] %vm89, %v893
  %902 = vst.msk [vmem:[#allocation3 + $0x20] sm:$0xff] %vm89, %v894
  %903 = vst.msk [vmem:[#allocation3 + $0x28] sm:$0xff] %vm89, %v895
  %904 = vst.msk [vmem:[#allocation3 + $0x30] sm:$0xff] %vm89, %v896
  %905 = vst.msk [vmem:[#allocation3 + $0x38] sm:$0xff] %vm89, %v897
  %906 = vrot.lane.b32.xlu0 %v782, 64
  %v907 = vpop.permute.xlu0 %906
  %908 = vrot.lane.b32.xlu0 %v783, 64
  %v909 = vpop.permute.xlu0 %908
  %910 = vrot.lane.b32.xlu0 %v784, 64
  %v911 = vpop.permute.xlu0 %910
  %912 = vrot.lane.b32.xlu0 %v785, 64
  %v913 = vpop.permute.xlu0 %912
  %914 = vrot.lane.b32.xlu0 %v786, 64
  %v915 = vpop.permute.xlu0 %914
  %916 = vrot.lane.b32.xlu0 %v787, 64
  %v917 = vpop.permute.xlu0 %916
  %918 = vrot.lane.b32.xlu0 %v788, 64
  %v919 = vpop.permute.xlu0 %918
  %920 = vrot.lane.b32.xlu0 %v789, 64
  %v921 = vpop.permute.xlu0 %920
  %vm930 = vcmask 540160
  %931 = vst.msk [vmem:[#allocation3] sm:$0xff] %vm930, %v907
  %932 = vst.msk [vmem:[#allocation3 + $0x8] sm:$0xff] %vm930, %v909
  %933 = vst.msk [vmem:[#allocation3 + $0x10] sm:$0xff] %vm930, %v911
  %934 = vst.msk [vmem:[#allocation3 + $0x18] sm:$0xff] %vm930, %v913
  %935 = vst.msk [vmem:[#allocation3 + $0x20] sm:$0xff] %vm930, %v915
  %936 = vst.msk [vmem:[#allocation3 + $0x28] sm:$0xff] %vm930, %v917
  %937 = vst.msk [vmem:[#allocation3 + $0x30] sm:$0xff] %vm930, %v919
  %938 = vst.msk [vmem:[#allocation3 + $0x38] sm:$0xff] %vm930, %v921
  %v939 = vld [vmem:[#allocation3] sm:$0xff]
  %v940 = vld [vmem:[#allocation3 + $0x8] sm:$0xff]
  %v941 = vld [vmem:[#allocation3 + $0x10] sm:$0xff]
  %v942 = vld [vmem:[#allocation3 + $0x18] sm:$0xff]
  %v943 = vld [vmem:[#allocation3 + $0x20] sm:$0xff]
  %v944 = vld [vmem:[#allocation3 + $0x28] sm:$0xff]
  %v945 = vld [vmem:[#allocation3 + $0x30] sm:$0xff]
  %v946 = vld [vmem:[#allocation3 + $0x38] sm:$0xff]
  %947 = vmatpush.msra.mxu0 0.0
  %948 = vmatpush.msra.mxu0 0.0
  %949 = vmatpush.msra.mxu0 0.0
  %950 = vmatpush.msra.mxu0 0.0
  %951 = vmatpush.msra.mxu0 0.0
  %952 = vmatpush.msra.mxu0 0.0
  %953 = vmatpush.msra.mxu0 0.0
  %954 = vmatpush.msra.mxu0 0.0
  %955 = vmatpush.msra.mxu0 %v946
  %956 = vmatpush.msra.mxu0 %v945
  %957 = vmatpush.msra.mxu0 %v944
  %958 = vmatpush.msra.mxu0 %v943
  %959 = vmatpush.msra.mxu0 %v942
  %960 = vmatpush.msra.mxu0 %v941
  %961 = vmatpush.msra.mxu0 %v940
  %962 = vmatpush.msra.mxu0 %v939
  %963 = vmatmul.f32.gmra.mxu0 %v487
  %v964 = vpop.f32.mrf.mxu0
  %v965 = vadd.f32 0.0, %v964
  %966 = vdwg.mxu0
  %v967 = vmax.f32 %v965, 1e-20
  %v968 = vrcp.pop %v967
  %970 = vrot.lane.b32.xlu0 %v968, 64
  %v971 = vpop.permute.xlu0 %970
  %v972 = vsel %vm736, %v971, 0
  %974 = vmatpush.msra.mxu0 0.0
  %975 = vmatpush.msra.mxu0 0.0
  %976 = vmatpush.msra.mxu0 0.0
  %977 = vmatpush.msra.mxu0 0.0
  %978 = vmatpush.msra.mxu0 0.0
  %979 = vmatpush.msra.mxu0 0.0
  %980 = vmatpush.msra.mxu0 0.0
  %981 = vmatpush.msra.mxu0 0.0
  %982 = vmatpush.msra.mxu0 0.0
  %983 = vmatpush.msra.mxu0 0.0
  %984 = vmatpush.msra.mxu0 0.0
  %985 = vmatpush.msra.mxu0 0.0
  %986 = vmatpush.msra.mxu0 0.0
  %987 = vmatpush.msra.mxu0 0.0
  %988 = vmatpush.msra.mxu0 0.0
  %989 = vmatpush.msra.mxu0 %v815
  %990 = vmatmul.f32.gmra.mxu0 %v972
  %v991 = vpop.f32.mrf.mxu0
  %v992 = vadd.f32 0.0, %v991
  %993 = vdwg.mxu0
  %v994 = vmul.f32 %v965, %v992
  %v995 = vperm.slane %v559, 0
  %v996 = vadd.f32 %v994, %v995
  %v997 = vmax.f32 %v996, 0.0
  %v998 = vld [vmem:[%s6] sm:$0xff]
  %v999 = vld [vmem:[%s6 + $0x8] sm:$0xff]
  %v1000 = vld [vmem:[%s6 + $0x10] sm:$0xff]
  %v1001 = vld [vmem:[%s6 + $0x18] sm:$0xff]
  %v1002 = vld [vmem:[%s6 + $0x20] sm:$0xff]
  %v1003 = vld [vmem:[%s6 + $0x28] sm:$0xff]
  %v1004 = vld [vmem:[%s6 + $0x30] sm:$0xff]
  %v1005 = vld [vmem:[%s6 + $0x38] sm:$0xff]
  %v1006 = vld [vmem:[%s6 + $0x40] sm:$0x1]
  %v1007 = vperm.slane %v1006, 0
  %v1009 = vsel %vm89, %v997, 0
  %1011 = vmatpush.msra.mxu0 0.0
  %1012 = vmatpush.msra.mxu0 0.0
  %1013 = vmatpush.msra.mxu0 0.0
  %1014 = vmatpush.msra.mxu0 0.0
  %1015 = vmatpush.msra.mxu0 0.0
  %1016 = vmatpush.msra.mxu0 0.0
  %1017 = vmatpush.msra.mxu0 0.0
  %1018 = vmatpush.msra.mxu0 0.0
  %1019 = vmatpush.msra.mxu0 %v1005
  %1020 = vmatpush.msra.mxu0 %v1004
  %1021 = vmatpush.msra.mxu0 %v1003
  %1022 = vmatpush.msra.mxu0 %v1002
  %1023 = vmatpush.msra.mxu0 %v1001
  %1024 = vmatpush.msra.mxu0 %v1000
  %1025 = vmatpush.msra.mxu0 %v999
  %1026 = vmatpush.msra.mxu0 %v998
  %1027 = vmatmul.f32.gmra.mxu0 %v1009
  %v1028 = vpop.f32.mrf.mxu0
  %v1029 = vadd.f32 %v1007, %v1028
  %1030 = vdwg.mxu0
  %v1031 = vtanh.pop %v1029
  %1032 = vst.msk [vmem:[%s7] sm:$0xff] %vm274, %v1031
  // Predicated region
  $region30: #{_gnn_policy_forward.1} parent=0 // pred_check
    _
  $region31: #{_gnn_policy_forward.1} parent=0 // pred_check_branch
    %1034 = sbr.rel (0) target = $region33
  $region32: #{_gnn_policy_forward.1} parent=0 // pred_region
    _
  $region33: #{_gnn_policy_forward.1} parent=0 // pred_fallthru
    _
  // Predicated region
  $region34: #{_gnn_policy_forward.1} parent=0 // pred_check
    _
  $region35: #{_gnn_policy_forward.1} parent=0 // pred_check_branch
    %1036 = sbr.rel (0) target = $region37
  $region36: #{_gnn_policy_forward.1} parent=0 // pred_region
    _
  $region37: #{_gnn_policy_forward.1} parent=0 // pred_fallthru
    _

</llo_original>
